<compile_context>
chip_gen: v7x
topology: tpu7x:2x2x1
jax: 0.10.0
libtpu: 0.0.40
codegen_flags: <defaults>
</compile_context>

<pallas_src>
import jax
import jax.numpy as jnp
import numpy as np
from jax.experimental import pallas as pl
from jax.experimental.pallas import tpu as pltpu

PAD = 3   # reflect padding for the 7x7 convolutions
KS = 7    # conv kernel size
_HI = jax.lax.Precision.HIGHEST


# --------------------------------- kernel -----------------------------------
def _cga_fusion_kernel(x0_ref, x1_ref, ini_pad_ref, sa_pad_ref,
                       ca_w1_ref, ca_b1_ref, ca_w2_ref, ca_b2_ref,
                       sa_band_a_ref, sa_band_m_ref,
                       pa_band0_ref, pa_band1_ref,
                       pa_const_ref, pa_w1sum_ref,
                       sel_g_ref, sel_s_ref, ph_ref, pwrep_ref,
                       conv_blk_ref, conv_b_ref,
                       out_ref):
    f32 = jnp.float32
    H, WC = x0_ref.shape
    C = sel_g_ref.shape[1]
    W = WC // C

    def mm(a, b):
        return jnp.dot(a, b, precision=_HI, preferred_element_type=f32)

    x0 = x0_ref[...].astype(f32)                      # (H, W*C), lane-dense
    x1 = x1_ref[...].astype(f32)
    initial = x0 + x1

    # ---- Channel attention: GAP (sublane sum + MXU gather matmul) -> MLP ----
    colsum = jnp.sum(initial, axis=0, keepdims=True)          # (1, W*C)
    gap = mm(colsum, sel_g_ref[...]) * (1.0 / (H * W))        # (1, C)
    hdn = jnp.maximum(mm(gap, ca_w1_ref[...]) + ca_b1_ref[...], 0.0)
    cattn = mm(hdn, ca_w2_ref[...]) + ca_b2_ref[...]          # (1, C)
    cattn_t = mm(cattn, sel_s_ref[...])                       # (1, W*C), tiled over W

    # ---- Spatial attention: 7x7 conv over [avg, max] as banded MXU matmuls ----
    sa_pad = sa_pad_ref[...]                                  # (2, H+6, W+6)
    avg_pad, max_pad = sa_pad[0], sa_pad[1]
    sattn = jnp.zeros((H, W), f32)
    for dh in range(KS):
        sattn = (sattn
                 + mm(avg_pad[dh:dh + H, :], sa_band_a_ref[dh])
                 + mm(max_pad[dh:dh + H, :], sa_band_m_ref[dh]))
    # (the sa bias is folded into pa_const in the wrapper)

    # ---- Reflect-pad + channel-replicate sattn via selection matmuls ----
    s_pad = mm(ph_ref[...], mm(sattn, pwrep_ref[...]))        # (H+6, (W+6)*C)

    # ---- Pixel attention: grouped 7x7 conv as banded MXU matmuls ----
    ini_pad = ini_pad_ref[...]                                # (H+6, (W+6)*C)
    acc = jnp.zeros((H, WC), f32)
    for dh in range(KS):
        acc = (acc
               + mm(ini_pad[dh:dh + H, :], pa_band0_ref[dh])
               + mm(s_pad[dh:dh + H, :], pa_band1_ref[dh]))
    acc = acc + (pa_const_ref[...] + cattn_t * pa_w1sum_ref[...])
    # PixelAttention applies a sigmoid, and CGAFusion applies another one.
    pattn2 = jax.nn.sigmoid(jax.nn.sigmoid(acc))

    # ---- Fusion + final 1x1 conv (block-diagonal, lane-aligned matmul) ----
    result = initial + pattn2 * x0 + (1.0 - pattn2) * x1
    out = mm(result, conv_blk_ref[...]) + conv_b_ref[...]
    out_ref[...] = out.astype(out_ref.dtype)


# -------------------------------- wrapper ------------------------------------
def _reflect_index(n, pad):
    idx = np.arange(-pad, n + pad)
    idx = np.where(idx < 0, -idx, idx)
    idx = np.where(idx >= n, 2 * n - 2 - idx, idx)
    return idx


def _banded_along_w(w, W):
    """(KS, KS, Cw) depthwise taps -> (KS, (W+KS-1)*Cw, W*Cw) banded matrices.

    B[dh, (w+dw)*Cw + c, w*Cw + c] = w[dh, dw, c], so `padded_row @ B[dh]`
    applies all dw taps for every output column w / channel c at once.
    """
    Cw = w.shape[-1]
    Wp = W + KS - 1
    J, M = np.meshgrid(np.arange(Wp * Cw), np.arange(W * Cw), indexing="ij")
    dw = J // Cw - M // Cw
    valid = (J % Cw == M % Cw) & (dw >= 0) & (dw < KS)
    gathered = w[:, np.clip(dw, 0, KS - 1), M % Cw]           # (KS, Wp*Cw, W*Cw)
    return jnp.where(jnp.asarray(valid)[None], gathered, 0.0).astype(jnp.float32)


def cga_fusion(x0, x1, p):
    B, H, W, C = x0.shape
    Hp, Wp = H + 2 * PAD, W + 2 * PAD
    WC, WpC = W * C, Wp * C
    f32 = jnp.float32

    x0 = x0.astype(f32)
    x1 = x1.astype(f32)

    # ---- lane-dense reshapes + reflect padding done once in XLA ----
    initial = x0 + x1
    ini_pad_f = jnp.pad(initial, ((0, 0), (PAD, PAD), (PAD, PAD), (0, 0)),
                        mode="reflect").reshape(B, Hp, WpC)
    x0_f = x0.reshape(B, H, WC)
    x1_f = x1.reshape(B, H, WC)
    sa_in = jnp.stack([jnp.mean(initial, axis=-1), jnp.max(initial, axis=-1)], axis=1)
    sa_pad = jnp.pad(sa_in, ((0, 0), (0, 0), (PAD, PAD), (PAD, PAD)), mode="reflect")

    # ---- constant selection / reflection matrices ----
    rh = _reflect_index(H, PAD)
    rw = _reflect_index(W, PAD)
    ph = jnp.asarray((rh[:, None] == np.arange(H)[None, :]).astype(np.float32))      # (Hp, H)
    pwrep = jnp.asarray(np.repeat(
        (np.arange(W)[:, None] == rw[None, :]).astype(np.float32), C, axis=1))       # (W, WpC)
    sel_g = jnp.asarray(np.tile(np.eye(C, dtype=np.float32), (W, 1)))                # (WC, C)
    sel_s = jnp.asarray(np.tile(np.eye(C, dtype=np.float32), (W, 1)).T)              # (C, WC)

    # ---- conv weights re-expressed for the kernel ----
    sa_band_a = _banded_along_w(p["sa_w"][:, :, 0:1], W)      # (KS, Wp, W)  avg taps
    sa_band_m = _banded_along_w(p["sa_w"][:, :, 1:2], W)      # (KS, Wp, W)  max taps
    pa_band0 = _banded_along_w(p["pa_w0"], W)                 # (KS, WpC, WC)
    pa_band1 = _banded_along_w(p["pa_w1"], W)                 # (KS, WpC, WC)

    pa_w1sum_t = jnp.tile(jnp.sum(p["pa_w1"], axis=(0, 1)), W)[None, :]              # (1, WC)
    pa_const = (jnp.tile(p["pa_b"].reshape(C), W)[None, :]
                + p["sa_b"].reshape(()) * pa_w1sum_t)                                # (1, WC)
    conv_blk = jnp.kron(jnp.eye(W, dtype=f32), p["conv_w"])                          # (WC, WC)
    conv_b_t = jnp.tile(p["conv_b"].reshape(C), W)[None, :]                          # (1, WC)

    w_args = [p["ca_w1"], p["ca_b1"], p["ca_w2"], p["ca_b2"],
              sa_band_a, sa_band_m, pa_band0, pa_band1,
              pa_const, pa_w1sum_t, sel_g, sel_s, ph, pwrep, conv_blk, conv_b_t]

    def img_spec(shape):
        n = len(shape)
        return pl.BlockSpec((None,) + shape, lambda b, _n=n: (b,) + (0,) * _n)

    def full_spec(a):
        n = a.ndim
        return pl.BlockSpec(a.shape, lambda b, _n=n: (0,) * _n)

    in_specs = ([img_spec((H, WC)), img_spec((H, WC)),
                 img_spec((Hp, WpC)), img_spec((2, Hp, Wp))]
                + [full_spec(a) for a in w_args])

    # TODO(synk): for large resolutions on v7x (64 MiB VMEM), add an H-tile grid
    # axis with a 3-row halo (overlapping index_map on the pre-padded inputs)
    # plus a separate GAP pass, instead of one block per image.
    out_f = pl.pallas_call(
        _cga_fusion_kernel,
        out_shape=jax.ShapeDtypeStruct((B, H, WC), f32),
        grid=(B,),
        in_specs=in_specs,
        out_specs=img_spec((H, WC)),
        compiler_params=pltpu.CompilerParams(dimension_semantics=("parallel",)),
    )(x0_f, x1_f, ini_pad_f, sa_pad, *w_args)
    return out_f.reshape(B, H, W, C)


# ------------------------- pure-JAX reference (NHWC) -------------------------
def _reflect_pad_nhwc(a, pad=PAD):
    return jnp.pad(a, ((0, 0), (pad, pad), (pad, pad), (0, 0)), mode="reflect")


def cga_reference(x0, x1, p):
    B, H, W, C = x0.shape
    initial = x0 + x1
    gap = jnp.mean(initial, axis=(1, 2))                                   # (B, C)
    hdn = jax.nn.relu(jnp.dot(gap, p["ca_w1"], precision=_HI) + p["ca_b1"])
    cattn = jnp.dot(hdn, p["ca_w2"], precision=_HI) + p["ca_b2"]           # (B, C)

    x_avg = jnp.mean(initial, axis=-1, keepdims=True)
    x_max = jnp.max(initial, axis=-1, keepdims=True)
    sa_pad = _reflect_pad_nhwc(jnp.concatenate([x_avg, x_max], axis=-1))
    sattn = jnp.zeros((B, H, W, 1), jnp.float32)
    for dh in range(KS):
        for dw in range(KS):
            sattn = sattn + jnp.sum(sa_pad[:, dh:dh + H, dw:dw + W, :] * p["sa_w"][dh, dw],
                                    axis=-1, keepdims=True)
    sattn = sattn + p["sa_b"]

    pattn1 = sattn + cattn[:, None, None, :]
    ini_pad = _reflect_pad_nhwc(initial)
    pa1_pad = _reflect_pad_nhwc(pattn1)
    pa_acc = jnp.zeros((B, H, W, C), jnp.float32)
    for dh in range(KS):
        for dw in range(KS):
            pa_acc = (pa_acc
                      + ini_pad[:, dh:dh + H, dw:dw + W, :] * p["pa_w0"][dh, dw]
                      + pa1_pad[:, dh:dh + H, dw:dw + W, :] * p["pa_w1"][dh, dw])
    pa_acc = pa_acc + p["pa_b"]
    pattn2 = jax.nn.sigmoid(jax.nn.sigmoid(pa_acc))
    result = initial + pattn2 * x0 + (1.0 - pattn2) * x1
    return jnp.einsum("bhwc,cd->bhwd", result, p["conv_w"], precision=_HI) + p["conv_b"]


# ------------------------------------ main -----------------------------------
if __name__ == "__main__":
    B, C, H, W = 2, 8, 16, 16
    reduction = 2
    Cr = C // reduction

    key = jax.random.PRNGKey(0)
    keys = jax.random.split(key, 16)

    def rnd(k, shape, scale=0.1):
        return (scale * jax.random.normal(k, shape, jnp.float32)).astype(jnp.float32)

    params = {
        # ChannelAttention: 1x1 convs as (Cin, Cout) matrices + biases
        "ca_w1": rnd(keys[0], (C, Cr)),
        "ca_b1": rnd(keys[1], (1, Cr)),
        "ca_w2": rnd(keys[2], (Cr, C)),
        "ca_b2": rnd(keys[3], (1, C)),
        # SpatialAttention: 7x7 conv (2 -> 1), weight (7,7,2) [avg, max], scalar bias
        "sa_w": rnd(keys[4], (KS, KS, 2)),
        "sa_b": rnd(keys[5], (1, 1, 1)),
        # PixelAttention: grouped 7x7 conv (2C -> C, groups=C):
        # pa_w0 applies to `initial`, pa_w1 applies to `pattn1`
        "pa_w0": rnd(keys[6], (KS, KS, C)),
        "pa_w1": rnd(keys[7], (KS, KS, C)),
        "pa_b": rnd(keys[8], (1, 1, C)),
        # Final 1x1 conv
        "conv_w": rnd(keys[9], (C, C)),
        "conv_b": rnd(keys[10], (1, C)),
    }

    x0 = jax.random.normal(keys[11], (B, H, W, C), jnp.float32)
    x1 = jax.random.normal(keys[12], (B, H, W, C), jnp.float32)

    out = jax.block_until_ready(jax.jit(cga_fusion)(x0, x1, params))
    ref = jax.block_until_ready(cga_reference(x0, x1, params))

    np.testing.assert_allclose(np.asarray(out), np.asarray(ref), rtol=2e-3, atol=2e-3)
    print("KERNEL_OK")
</pallas_src>

<mosaic_0001>
module attributes {stable_mosaic.version = 11 : i64} {
  func.func @_cga_fusion_kernel(%arg0: i32, %arg1: memref<1x16x128xf32, #tpu.memory_space<vmem>>, %arg2: memref<1x16x128xf32, #tpu.memory_space<vmem>>, %arg3: memref<1x22x176xf32, #tpu.memory_space<vmem>>, %arg4: memref<1x2x22x22xf32, #tpu.memory_space<vmem>>, %arg5: memref<8x4xf32, #tpu.memory_space<vmem>>, %arg6: memref<1x4xf32, #tpu.memory_space<vmem>>, %arg7: memref<4x8xf32, #tpu.memory_space<vmem>>, %arg8: memref<1x8xf32, #tpu.memory_space<vmem>>, %arg9: memref<7x22x16xf32, #tpu.memory_space<vmem>>, %arg10: memref<7x22x16xf32, #tpu.memory_space<vmem>>, %arg11: memref<7x176x128xf32, #tpu.memory_space<vmem>>, %arg12: memref<7x176x128xf32, #tpu.memory_space<vmem>>, %arg13: memref<1x128xf32, #tpu.memory_space<vmem>>, %arg14: memref<1x128xf32, #tpu.memory_space<vmem>>, %arg15: memref<128x8xf32, #tpu.memory_space<vmem>>, %arg16: memref<8x128xf32, #tpu.memory_space<vmem>>, %arg17: memref<22x16xf32, #tpu.memory_space<vmem>>, %arg18: memref<16x176xf32, #tpu.memory_space<vmem>>, %arg19: memref<128x128xf32, #tpu.memory_space<vmem>>, %arg20: memref<1x128xf32, #tpu.memory_space<vmem>>, %arg21: memref<1x16x128xf32, #tpu.memory_space<vmem>>) attributes {dimension_semantics = [#tpu.dimension_semantics<parallel>], iteration_bounds = array<i64: 2>, scalar_prefetch = 0 : i64, scratch_operands = 0 : i64, tpu.core_type = #tpu.core_type<tc>, window_params = [{transform_indices = @transform_0, window_bounds = array<i64: 1, 16, 128>}, {transform_indices = @transform_1, window_bounds = array<i64: 1, 16, 128>}, {transform_indices = @transform_2, window_bounds = array<i64: 1, 22, 176>}, {transform_indices = @transform_3, window_bounds = array<i64: 1, 2, 22, 22>}, {pipeline_mode = #tpu.pipeline_mode<synchronous>, transform_indices = @transform_4, window_bounds = array<i64: 8, 4>}, {pipeline_mode = #tpu.pipeline_mode<synchronous>, transform_indices = @transform_5, window_bounds = array<i64: 1, 4>}, {pipeline_mode = #tpu.pipeline_mode<synchronous>, transform_indices = @transform_6, window_bounds = array<i64: 4, 8>}, {pipeline_mode = #tpu.pipeline_mode<synchronous>, transform_indices = @transform_7, window_bounds = array<i64: 1, 8>}, {pipeline_mode = #tpu.pipeline_mode<synchronous>, transform_indices = @transform_8, window_bounds = array<i64: 7, 22, 16>}, {pipeline_mode = #tpu.pipeline_mode<synchronous>, transform_indices = @transform_9, window_bounds = array<i64: 7, 22, 16>}, {pipeline_mode = #tpu.pipeline_mode<synchronous>, transform_indices = @transform_10, window_bounds = array<i64: 7, 176, 128>}, {pipeline_mode = #tpu.pipeline_mode<synchronous>, transform_indices = @transform_11, window_bounds = array<i64: 7, 176, 128>}, {pipeline_mode = #tpu.pipeline_mode<synchronous>, transform_indices = @transform_12, window_bounds = array<i64: 1, 128>}, {pipeline_mode = #tpu.pipeline_mode<synchronous>, transform_indices = @transform_13, window_bounds = array<i64: 1, 128>}, {pipeline_mode = #tpu.pipeline_mode<synchronous>, transform_indices = @transform_14, window_bounds = array<i64: 128, 8>}, {pipeline_mode = #tpu.pipeline_mode<synchronous>, transform_indices = @transform_15, window_bounds = array<i64: 8, 128>}, {pipeline_mode = #tpu.pipeline_mode<synchronous>, transform_indices = @transform_16, window_bounds = array<i64: 22, 16>}, {pipeline_mode = #tpu.pipeline_mode<synchronous>, transform_indices = @transform_17, window_bounds = array<i64: 16, 176>}, {pipeline_mode = #tpu.pipeline_mode<synchronous>, transform_indices = @transform_18, window_bounds = array<i64: 128, 128>}, {pipeline_mode = #tpu.pipeline_mode<synchronous>, transform_indices = @transform_19, window_bounds = array<i64: 1, 128>}, {transform_indices = @transform_20, window_bounds = array<i64: 1, 16, 128>}]} {
    %c0 = arith.constant 0 : index
    %c0_0 = arith.constant 0 : index
    %c0_1 = arith.constant 0 : index
    %0 = vector.load %arg1[%c0, %c0_0, %c0_1] : memref<1x16x128xf32, #tpu.memory_space<vmem>>, vector<1x16x128xf32>
    %1 = vector.shape_cast %0 : vector<1x16x128xf32> to vector<16x128xf32>
    %c0_2 = arith.constant 0 : index
    %c0_3 = arith.constant 0 : index
    %c0_4 = arith.constant 0 : index
    %2 = vector.load %arg2[%c0_2, %c0_3, %c0_4] : memref<1x16x128xf32, #tpu.memory_space<vmem>>, vector<1x16x128xf32>
    %3 = vector.shape_cast %2 : vector<1x16x128xf32> to vector<16x128xf32>
    %4 = arith.addf %1, %3 : vector<16x128xf32>
    %cst = arith.constant dense<0.000000e+00> : vector<128xf32>
    %5 = vector.multi_reduction <add>, %4, %cst [0] : vector<16x128xf32> to vector<128xf32>
    %6 = vector.shape_cast %5 : vector<128xf32> to vector<1x128xf32>
    %c0_5 = arith.constant 0 : index
    %c0_6 = arith.constant 0 : index
    %7 = vector.load %arg15[%c0_5, %c0_6] : memref<128x8xf32, #tpu.memory_space<vmem>>, vector<128x8xf32>
    %cst_7 = arith.constant dense<0.000000e+00> : vector<1x8xf32>
    %8 = tpu.matmul %6, %7, %cst_7 {dimension_numbers = #tpu.dot_dimension_numbers<[1], [0], [0], [1], [0, 0, 1, 1], [], []>, precision = #tpu.contract_precision<fp32>} : vector<1x128xf32>, vector<128x8xf32>, vector<1x8xf32> -> vector<1x8xf32>
    %cst_8 = arith.constant 3.906250e-03 : f32
    %9 = vector.broadcast %cst_8 : f32 to vector<1x8xf32>
    %10 = arith.mulf %8, %9 : vector<1x8xf32>
    %c0_9 = arith.constant 0 : index
    %c0_10 = arith.constant 0 : index
    %11 = vector.load %arg5[%c0_9, %c0_10] : memref<8x4xf32, #tpu.memory_space<vmem>>, vector<8x4xf32>
    %cst_11 = arith.constant dense<0.000000e+00> : vector<1x4xf32>
    %12 = tpu.matmul %10, %11, %cst_11 {dimension_numbers = #tpu.dot_dimension_numbers<[1], [0], [0], [1], [0, 0, 1, 1], [], []>, precision = #tpu.contract_precision<fp32>} : vector<1x8xf32>, vector<8x4xf32>, vector<1x4xf32> -> vector<1x4xf32>
    %c0_12 = arith.constant 0 : index
    %c0_13 = arith.constant 0 : index
    %13 = vector.load %arg6[%c0_12, %c0_13] : memref<1x4xf32, #tpu.memory_space<vmem>>, vector<1x4xf32>
    %14 = arith.addf %12, %13 : vector<1x4xf32>
    %cst_14 = arith.constant 0.000000e+00 : f32
    %15 = vector.broadcast %cst_14 : f32 to vector<1x4xf32>
    %16 = arith.maximumf %14, %15 : vector<1x4xf32>
    %c0_15 = arith.constant 0 : index
    %c0_16 = arith.constant 0 : index
    %17 = vector.load %arg7[%c0_15, %c0_16] : memref<4x8xf32, #tpu.memory_space<vmem>>, vector<4x8xf32>
    %cst_17 = arith.constant dense<0.000000e+00> : vector<1x8xf32>
    %18 = tpu.matmul %16, %17, %cst_17 {dimension_numbers = #tpu.dot_dimension_numbers<[1], [0], [0], [1], [0, 0, 1, 1], [], []>, precision = #tpu.contract_precision<fp32>} : vector<1x4xf32>, vector<4x8xf32>, vector<1x8xf32> -> vector<1x8xf32>
    %c0_18 = arith.constant 0 : index
    %c0_19 = arith.constant 0 : index
    %19 = vector.load %arg8[%c0_18, %c0_19] : memref<1x8xf32, #tpu.memory_space<vmem>>, vector<1x8xf32>
    %20 = arith.addf %18, %19 : vector<1x8xf32>
    %c0_20 = arith.constant 0 : index
    %c0_21 = arith.constant 0 : index
    %21 = vector.load %arg16[%c0_20, %c0_21] : memref<8x128xf32, #tpu.memory_space<vmem>>, vector<8x128xf32>
    %cst_22 = arith.constant dense<0.000000e+00> : vector<1x128xf32>
    %22 = tpu.matmul %20, %21, %cst_22 {dimension_numbers = #tpu.dot_dimension_numbers<[1], [0], [0], [1], [0, 0, 1, 1], [], []>, precision = #tpu.contract_precision<fp32>} : vector<1x8xf32>, vector<8x128xf32>, vector<1x128xf32> -> vector<1x128xf32>
    %c0_23 = arith.constant 0 : index
    %c0_24 = arith.constant 0 : index
    %c0_25 = arith.constant 0 : index
    %c0_26 = arith.constant 0 : index
    %23 = vector.load %arg4[%c0_23, %c0_24, %c0_25, %c0_26] : memref<1x2x22x22xf32, #tpu.memory_space<vmem>>, vector<1x2x22x22xf32>
    %24 = vector.shape_cast %23 : vector<1x2x22x22xf32> to vector<2x22x22xf32>
    %25 = vector.extract_strided_slice %24 {offsets = [0, 0, 0], sizes = [1, 22, 22], strides = [1, 1, 1]} : vector<2x22x22xf32> to vector<1x22x22xf32>
    %26 = vector.shape_cast %25 : vector<1x22x22xf32> to vector<22x22xf32>
    %27 = vector.extract_strided_slice %24 {offsets = [1, 0, 0], sizes = [1, 22, 22], strides = [1, 1, 1]} : vector<2x22x22xf32> to vector<1x22x22xf32>
    %28 = vector.shape_cast %27 : vector<1x22x22xf32> to vector<22x22xf32>
    %cst_27 = arith.constant 0.000000e+00 : f32
    %29 = vector.broadcast %cst_27 : f32 to vector<16x16xf32>
    %30 = vector.extract_strided_slice %26 {offsets = [0, 0], sizes = [16, 22], strides = [1, 1]} : vector<22x22xf32> to vector<16x22xf32>
    %c0_28 = arith.constant 0 : index
    %c0_29 = arith.constant 0 : index
    %c0_30 = arith.constant 0 : index
    %31 = vector.load %arg9[%c0_28, %c0_29, %c0_30] : memref<7x22x16xf32, #tpu.memory_space<vmem>>, vector<1x22x16xf32>
    %32 = vector.shape_cast %31 : vector<1x22x16xf32> to vector<22x16xf32>
    %cst_31 = arith.constant dense<0.000000e+00> : vector<16x16xf32>
    %33 = tpu.matmul %30, %32, %cst_31 {dimension_numbers = #tpu.dot_dimension_numbers<[1], [0], [0], [1], [0, 0, 1, 1], [], []>, precision = #tpu.contract_precision<fp32>} : vector<16x22xf32>, vector<22x16xf32>, vector<16x16xf32> -> vector<16x16xf32>
    %34 = arith.addf %29, %33 : vector<16x16xf32>
    %35 = vector.extract_strided_slice %28 {offsets = [0, 0], sizes = [16, 22], strides = [1, 1]} : vector<22x22xf32> to vector<16x22xf32>
    %c0_32 = arith.constant 0 : index
    %c0_33 = arith.constant 0 : index
    %c0_34 = arith.constant 0 : index
    %36 = vector.load %arg10[%c0_32, %c0_33, %c0_34] : memref<7x22x16xf32, #tpu.memory_space<vmem>>, vector<1x22x16xf32>
    %37 = vector.shape_cast %36 : vector<1x22x16xf32> to vector<22x16xf32>
    %cst_35 = arith.constant dense<0.000000e+00> : vector<16x16xf32>
    %38 = tpu.matmul %35, %37, %cst_35 {dimension_numbers = #tpu.dot_dimension_numbers<[1], [0], [0], [1], [0, 0, 1, 1], [], []>, precision = #tpu.contract_precision<fp32>} : vector<16x22xf32>, vector<22x16xf32>, vector<16x16xf32> -> vector<16x16xf32>
    %39 = arith.addf %34, %38 : vector<16x16xf32>
    %40 = vector.extract_strided_slice %26 {offsets = [1, 0], sizes = [16, 22], strides = [1, 1]} : vector<22x22xf32> to vector<16x22xf32>
    %c1 = arith.constant 1 : index
    %c0_36 = arith.constant 0 : index
    %c0_37 = arith.constant 0 : index
    %41 = vector.load %arg9[%c1, %c0_36, %c0_37] : memref<7x22x16xf32, #tpu.memory_space<vmem>>, vector<1x22x16xf32>
    %42 = vector.shape_cast %41 : vector<1x22x16xf32> to vector<22x16xf32>
    %cst_38 = arith.constant dense<0.000000e+00> : vector<16x16xf32>
    %43 = tpu.matmul %40, %42, %cst_38 {dimension_numbers = #tpu.dot_dimension_numbers<[1], [0], [0], [1], [0, 0, 1, 1], [], []>, precision = #tpu.contract_precision<fp32>} : vector<16x22xf32>, vector<22x16xf32>, vector<16x16xf32> -> vector<16x16xf32>
    %44 = arith.addf %39, %43 : vector<16x16xf32>
    %45 = vector.extract_strided_slice %28 {offsets = [1, 0], sizes = [16, 22], strides = [1, 1]} : vector<22x22xf32> to vector<16x22xf32>
    %c1_39 = arith.constant 1 : index
    %c0_40 = arith.constant 0 : index
    %c0_41 = arith.constant 0 : index
    %46 = vector.load %arg10[%c1_39, %c0_40, %c0_41] : memref<7x22x16xf32, #tpu.memory_space<vmem>>, vector<1x22x16xf32>
    %47 = vector.shape_cast %46 : vector<1x22x16xf32> to vector<22x16xf32>
    %cst_42 = arith.constant dense<0.000000e+00> : vector<16x16xf32>
    %48 = tpu.matmul %45, %47, %cst_42 {dimension_numbers = #tpu.dot_dimension_numbers<[1], [0], [0], [1], [0, 0, 1, 1], [], []>, precision = #tpu.contract_precision<fp32>} : vector<16x22xf32>, vector<22x16xf32>, vector<16x16xf32> -> vector<16x16xf32>
    %49 = arith.addf %44, %48 : vector<16x16xf32>
    %50 = vector.extract_strided_slice %26 {offsets = [2, 0], sizes = [16, 22], strides = [1, 1]} : vector<22x22xf32> to vector<16x22xf32>
    %c2 = arith.constant 2 : index
    %c0_43 = arith.constant 0 : index
    %c0_44 = arith.constant 0 : index
    %51 = vector.load %arg9[%c2, %c0_43, %c0_44] : memref<7x22x16xf32, #tpu.memory_space<vmem>>, vector<1x22x16xf32>
    %52 = vector.shape_cast %51 : vector<1x22x16xf32> to vector<22x16xf32>
    %cst_45 = arith.constant dense<0.000000e+00> : vector<16x16xf32>
    %53 = tpu.matmul %50, %52, %cst_45 {dimension_numbers = #tpu.dot_dimension_numbers<[1], [0], [0], [1], [0, 0, 1, 1], [], []>, precision = #tpu.contract_precision<fp32>} : vector<16x22xf32>, vector<22x16xf32>, vector<16x16xf32> -> vector<16x16xf32>
    %54 = arith.addf %49, %53 : vector<16x16xf32>
    %55 = vector.extract_strided_slice %28 {offsets = [2, 0], sizes = [16, 22], strides = [1, 1]} : vector<22x22xf32> to vector<16x22xf32>
    %c2_46 = arith.constant 2 : index
    %c0_47 = arith.constant 0 : index
    %c0_48 = arith.constant 0 : index
    %56 = vector.load %arg10[%c2_46, %c0_47, %c0_48] : memref<7x22x16xf32, #tpu.memory_space<vmem>>, vector<1x22x16xf32>
    %57 = vector.shape_cast %56 : vector<1x22x16xf32> to vector<22x16xf32>
    %cst_49 = arith.constant dense<0.000000e+00> : vector<16x16xf32>
    %58 = tpu.matmul %55, %57, %cst_49 {dimension_numbers = #tpu.dot_dimension_numbers<[1], [0], [0], [1], [0, 0, 1, 1], [], []>, precision = #tpu.contract_precision<fp32>} : vector<16x22xf32>, vector<22x16xf32>, vector<16x16xf32> -> vector<16x16xf32>
    %59 = arith.addf %54, %58 : vector<16x16xf32>
    %60 = vector.extract_strided_slice %26 {offsets = [3, 0], sizes = [16, 22], strides = [1, 1]} : vector<22x22xf32> to vector<16x22xf32>
    %c3 = arith.constant 3 : index
    %c0_50 = arith.constant 0 : index
    %c0_51 = arith.constant 0 : index
    %61 = vector.load %arg9[%c3, %c0_50, %c0_51] : memref<7x22x16xf32, #tpu.memory_space<vmem>>, vector<1x22x16xf32>
    %62 = vector.shape_cast %61 : vector<1x22x16xf32> to vector<22x16xf32>
    %cst_52 = arith.constant dense<0.000000e+00> : vector<16x16xf32>
    %63 = tpu.matmul %60, %62, %cst_52 {dimension_numbers = #tpu.dot_dimension_numbers<[1], [0], [0], [1], [0, 0, 1, 1], [], []>, precision = #tpu.contract_precision<fp32>} : vector<16x22xf32>, vector<22x16xf32>, vector<16x16xf32> -> vector<16x16xf32>
    %64 = arith.addf %59, %63 : vector<16x16xf32>
    %65 = vector.extract_strided_slice %28 {offsets = [3, 0], sizes = [16, 22], strides = [1, 1]} : vector<22x22xf32> to vector<16x22xf32>
    %c3_53 = arith.constant 3 : index
    %c0_54 = arith.constant 0 : index
    %c0_55 = arith.constant 0 : index
    %66 = vector.load %arg10[%c3_53, %c0_54, %c0_55] : memref<7x22x16xf32, #tpu.memory_space<vmem>>, vector<1x22x16xf32>
    %67 = vector.shape_cast %66 : vector<1x22x16xf32> to vector<22x16xf32>
    %cst_56 = arith.constant dense<0.000000e+00> : vector<16x16xf32>
    %68 = tpu.matmul %65, %67, %cst_56 {dimension_numbers = #tpu.dot_dimension_numbers<[1], [0], [0], [1], [0, 0, 1, 1], [], []>, precision = #tpu.contract_precision<fp32>} : vector<16x22xf32>, vector<22x16xf32>, vector<16x16xf32> -> vector<16x16xf32>
    %69 = arith.addf %64, %68 : vector<16x16xf32>
    %70 = vector.extract_strided_slice %26 {offsets = [4, 0], sizes = [16, 22], strides = [1, 1]} : vector<22x22xf32> to vector<16x22xf32>
    %c4 = arith.constant 4 : index
    %c0_57 = arith.constant 0 : index
    %c0_58 = arith.constant 0 : index
    %71 = vector.load %arg9[%c4, %c0_57, %c0_58] : memref<7x22x16xf32, #tpu.memory_space<vmem>>, vector<1x22x16xf32>
    %72 = vector.shape_cast %71 : vector<1x22x16xf32> to vector<22x16xf32>
    %cst_59 = arith.constant dense<0.000000e+00> : vector<16x16xf32>
    %73 = tpu.matmul %70, %72, %cst_59 {dimension_numbers = #tpu.dot_dimension_numbers<[1], [0], [0], [1], [0, 0, 1, 1], [], []>, precision = #tpu.contract_precision<fp32>} : vector<16x22xf32>, vector<22x16xf32>, vector<16x16xf32> -> vector<16x16xf32>
    %74 = arith.addf %69, %73 : vector<16x16xf32>
    %75 = vector.extract_strided_slice %28 {offsets = [4, 0], sizes = [16, 22], strides = [1, 1]} : vector<22x22xf32> to vector<16x22xf32>
    %c4_60 = arith.constant 4 : index
    %c0_61 = arith.constant 0 : index
    %c0_62 = arith.constant 0 : index
    %76 = vector.load %arg10[%c4_60, %c0_61, %c0_62] : memref<7x22x16xf32, #tpu.memory_space<vmem>>, vector<1x22x16xf32>
    %77 = vector.shape_cast %76 : vector<1x22x16xf32> to vector<22x16xf32>
    %cst_63 = arith.constant dense<0.000000e+00> : vector<16x16xf32>
    %78 = tpu.matmul %75, %77, %cst_63 {dimension_numbers = #tpu.dot_dimension_numbers<[1], [0], [0], [1], [0, 0, 1, 1], [], []>, precision = #tpu.contract_precision<fp32>} : vector<16x22xf32>, vector<22x16xf32>, vector<16x16xf32> -> vector<16x16xf32>
    %79 = arith.addf %74, %78 : vector<16x16xf32>
    %80 = vector.extract_strided_slice %26 {offsets = [5, 0], sizes = [16, 22], strides = [1, 1]} : vector<22x22xf32> to vector<16x22xf32>
    %c5 = arith.constant 5 : index
    %c0_64 = arith.constant 0 : index
    %c0_65 = arith.constant 0 : index
    %81 = vector.load %arg9[%c5, %c0_64, %c0_65] : memref<7x22x16xf32, #tpu.memory_space<vmem>>, vector<1x22x16xf32>
    %82 = vector.shape_cast %81 : vector<1x22x16xf32> to vector<22x16xf32>
    %cst_66 = arith.constant dense<0.000000e+00> : vector<16x16xf32>
    %83 = tpu.matmul %80, %82, %cst_66 {dimension_numbers = #tpu.dot_dimension_numbers<[1], [0], [0], [1], [0, 0, 1, 1], [], []>, precision = #tpu.contract_precision<fp32>} : vector<16x22xf32>, vector<22x16xf32>, vector<16x16xf32> -> vector<16x16xf32>
    %84 = arith.addf %79, %83 : vector<16x16xf32>
    %85 = vector.extract_strided_slice %28 {offsets = [5, 0], sizes = [16, 22], strides = [1, 1]} : vector<22x22xf32> to vector<16x22xf32>
    %c5_67 = arith.constant 5 : index
    %c0_68 = arith.constant 0 : index
    %c0_69 = arith.constant 0 : index
    %86 = vector.load %arg10[%c5_67, %c0_68, %c0_69] : memref<7x22x16xf32, #tpu.memory_space<vmem>>, vector<1x22x16xf32>
    %87 = vector.shape_cast %86 : vector<1x22x16xf32> to vector<22x16xf32>
    %cst_70 = arith.constant dense<0.000000e+00> : vector<16x16xf32>
    %88 = tpu.matmul %85, %87, %cst_70 {dimension_numbers = #tpu.dot_dimension_numbers<[1], [0], [0], [1], [0, 0, 1, 1], [], []>, precision = #tpu.contract_precision<fp32>} : vector<16x22xf32>, vector<22x16xf32>, vector<16x16xf32> -> vector<16x16xf32>
    %89 = arith.addf %84, %88 : vector<16x16xf32>
    %90 = vector.extract_strided_slice %26 {offsets = [6, 0], sizes = [16, 22], strides = [1, 1]} : vector<22x22xf32> to vector<16x22xf32>
    %c6 = arith.constant 6 : index
    %c0_71 = arith.constant 0 : index
    %c0_72 = arith.constant 0 : index
    %91 = vector.load %arg9[%c6, %c0_71, %c0_72] : memref<7x22x16xf32, #tpu.memory_space<vmem>>, vector<1x22x16xf32>
    %92 = vector.shape_cast %91 : vector<1x22x16xf32> to vector<22x16xf32>
    %cst_73 = arith.constant dense<0.000000e+00> : vector<16x16xf32>
    %93 = tpu.matmul %90, %92, %cst_73 {dimension_numbers = #tpu.dot_dimension_numbers<[1], [0], [0], [1], [0, 0, 1, 1], [], []>, precision = #tpu.contract_precision<fp32>} : vector<16x22xf32>, vector<22x16xf32>, vector<16x16xf32> -> vector<16x16xf32>
    %94 = arith.addf %89, %93 : vector<16x16xf32>
    %95 = vector.extract_strided_slice %28 {offsets = [6, 0], sizes = [16, 22], strides = [1, 1]} : vector<22x22xf32> to vector<16x22xf32>
    %c6_74 = arith.constant 6 : index
    %c0_75 = arith.constant 0 : index
    %c0_76 = arith.constant 0 : index
    %96 = vector.load %arg10[%c6_74, %c0_75, %c0_76] : memref<7x22x16xf32, #tpu.memory_space<vmem>>, vector<1x22x16xf32>
    %97 = vector.shape_cast %96 : vector<1x22x16xf32> to vector<22x16xf32>
    %cst_77 = arith.constant dense<0.000000e+00> : vector<16x16xf32>
    %98 = tpu.matmul %95, %97, %cst_77 {dimension_numbers = #tpu.dot_dimension_numbers<[1], [0], [0], [1], [0, 0, 1, 1], [], []>, precision = #tpu.contract_precision<fp32>} : vector<16x22xf32>, vector<22x16xf32>, vector<16x16xf32> -> vector<16x16xf32>
    %99 = arith.addf %94, %98 : vector<16x16xf32>
    %c0_78 = arith.constant 0 : index
    %c0_79 = arith.constant 0 : index
    %100 = vector.load %arg17[%c0_78, %c0_79] : memref<22x16xf32, #tpu.memory_space<vmem>>, vector<22x16xf32>
    %c0_80 = arith.constant 0 : index
    %c0_81 = arith.constant 0 : index
    %101 = vector.load %arg18[%c0_80, %c0_81] : memref<16x176xf32, #tpu.memory_space<vmem>>, vector<16x176xf32>
    %cst_82 = arith.constant dense<0.000000e+00> : vector<16x176xf32>
    %102 = tpu.matmul %99, %101, %cst_82 {dimension_numbers = #tpu.dot_dimension_numbers<[1], [0], [0], [1], [0, 0, 1, 1], [], []>, precision = #tpu.contract_precision<fp32>} : vector<16x16xf32>, vector<16x176xf32>, vector<16x176xf32> -> vector<16x176xf32>
    %cst_83 = arith.constant dense<0.000000e+00> : vector<22x176xf32>
    %103 = tpu.matmul %100, %102, %cst_83 {dimension_numbers = #tpu.dot_dimension_numbers<[1], [0], [0], [1], [0, 0, 1, 1], [], []>, precision = #tpu.contract_precision<fp32>} : vector<22x16xf32>, vector<16x176xf32>, vector<22x176xf32> -> vector<22x176xf32>
    %c0_84 = arith.constant 0 : index
    %c0_85 = arith.constant 0 : index
    %c0_86 = arith.constant 0 : index
    %104 = vector.load %arg3[%c0_84, %c0_85, %c0_86] : memref<1x22x176xf32, #tpu.memory_space<vmem>>, vector<1x22x176xf32>
    %105 = vector.shape_cast %104 : vector<1x22x176xf32> to vector<22x176xf32>
    %cst_87 = arith.constant 0.000000e+00 : f32
    %106 = vector.broadcast %cst_87 : f32 to vector<16x128xf32>
    %107 = vector.extract_strided_slice %105 {offsets = [0, 0], sizes = [16, 176], strides = [1, 1]} : vector<22x176xf32> to vector<16x176xf32>
    %c0_88 = arith.constant 0 : index
    %c0_89 = arith.constant 0 : index
    %c0_90 = arith.constant 0 : index
    %108 = vector.load %arg11[%c0_88, %c0_89, %c0_90] : memref<7x176x128xf32, #tpu.memory_space<vmem>>, vector<1x176x128xf32>
    %109 = vector.shape_cast %108 : vector<1x176x128xf32> to vector<176x128xf32>
    %cst_91 = arith.constant dense<0.000000e+00> : vector<16x128xf32>
    %110 = tpu.matmul %107, %109, %cst_91 {dimension_numbers = #tpu.dot_dimension_numbers<[1], [0], [0], [1], [0, 0, 1, 1], [], []>, precision = #tpu.contract_precision<fp32>} : vector<16x176xf32>, vector<176x128xf32>, vector<16x128xf32> -> vector<16x128xf32>
    %111 = arith.addf %106, %110 : vector<16x128xf32>
    %112 = vector.extract_strided_slice %103 {offsets = [0, 0], sizes = [16, 176], strides = [1, 1]} : vector<22x176xf32> to vector<16x176xf32>
    %c0_92 = arith.constant 0 : index
    %c0_93 = arith.constant 0 : index
    %c0_94 = arith.constant 0 : index
    %113 = vector.load %arg12[%c0_92, %c0_93, %c0_94] : memref<7x176x128xf32, #tpu.memory_space<vmem>>, vector<1x176x128xf32>
    %114 = vector.shape_cast %113 : vector<1x176x128xf32> to vector<176x128xf32>
    %cst_95 = arith.constant dense<0.000000e+00> : vector<16x128xf32>
    %115 = tpu.matmul %112, %114, %cst_95 {dimension_numbers = #tpu.dot_dimension_numbers<[1], [0], [0], [1], [0, 0, 1, 1], [], []>, precision = #tpu.contract_precision<fp32>} : vector<16x176xf32>, vector<176x128xf32>, vector<16x128xf32> -> vector<16x128xf32>
    %116 = arith.addf %111, %115 : vector<16x128xf32>
    %117 = vector.extract_strided_slice %105 {offsets = [1, 0], sizes = [16, 176], strides = [1, 1]} : vector<22x176xf32> to vector<16x176xf32>
    %c1_96 = arith.constant 1 : index
    %c0_97 = arith.constant 0 : index
    %c0_98 = arith.constant 0 : index
    %118 = vector.load %arg11[%c1_96, %c0_97, %c0_98] : memref<7x176x128xf32, #tpu.memory_space<vmem>>, vector<1x176x128xf32>
    %119 = vector.shape_cast %118 : vector<1x176x128xf32> to vector<176x128xf32>
    %cst_99 = arith.constant dense<0.000000e+00> : vector<16x128xf32>
    %120 = tpu.matmul %117, %119, %cst_99 {dimension_numbers = #tpu.dot_dimension_numbers<[1], [0], [0], [1], [0, 0, 1, 1], [], []>, precision = #tpu.contract_precision<fp32>} : vector<16x176xf32>, vector<176x128xf32>, vector<16x128xf32> -> vector<16x128xf32>
    %121 = arith.addf %116, %120 : vector<16x128xf32>
    %122 = vector.extract_strided_slice %103 {offsets = [1, 0], sizes = [16, 176], strides = [1, 1]} : vector<22x176xf32> to vector<16x176xf32>
    %c1_100 = arith.constant 1 : index
    %c0_101 = arith.constant 0 : index
    %c0_102 = arith.constant 0 : index
    %123 = vector.load %arg12[%c1_100, %c0_101, %c0_102] : memref<7x176x128xf32, #tpu.memory_space<vmem>>, vector<1x176x128xf32>
    %124 = vector.shape_cast %123 : vector<1x176x128xf32> to vector<176x128xf32>
    %cst_103 = arith.constant dense<0.000000e+00> : vector<16x128xf32>
    %125 = tpu.matmul %122, %124, %cst_103 {dimension_numbers = #tpu.dot_dimension_numbers<[1], [0], [0], [1], [0, 0, 1, 1], [], []>, precision = #tpu.contract_precision<fp32>} : vector<16x176xf32>, vector<176x128xf32>, vector<16x128xf32> -> vector<16x128xf32>
    %126 = arith.addf %121, %125 : vector<16x128xf32>
    %127 = vector.extract_strided_slice %105 {offsets = [2, 0], sizes = [16, 176], strides = [1, 1]} : vector<22x176xf32> to vector<16x176xf32>
    %c2_104 = arith.constant 2 : index
    %c0_105 = arith.constant 0 : index
    %c0_106 = arith.constant 0 : index
    %128 = vector.load %arg11[%c2_104, %c0_105, %c0_106] : memref<7x176x128xf32, #tpu.memory_space<vmem>>, vector<1x176x128xf32>
    %129 = vector.shape_cast %128 : vector<1x176x128xf32> to vector<176x128xf32>
    %cst_107 = arith.constant dense<0.000000e+00> : vector<16x128xf32>
    %130 = tpu.matmul %127, %129, %cst_107 {dimension_numbers = #tpu.dot_dimension_numbers<[1], [0], [0], [1], [0, 0, 1, 1], [], []>, precision = #tpu.contract_precision<fp32>} : vector<16x176xf32>, vector<176x128xf32>, vector<16x128xf32> -> vector<16x128xf32>
    %131 = arith.addf %126, %130 : vector<16x128xf32>
    %132 = vector.extract_strided_slice %103 {offsets = [2, 0], sizes = [16, 176], strides = [1, 1]} : vector<22x176xf32> to vector<16x176xf32>
    %c2_108 = arith.constant 2 : index
    %c0_109 = arith.constant 0 : index
    %c0_110 = arith.constant 0 : index
    %133 = vector.load %arg12[%c2_108, %c0_109, %c0_110] : memref<7x176x128xf32, #tpu.memory_space<vmem>>, vector<1x176x128xf32>
    %134 = vector.shape_cast %133 : vector<1x176x128xf32> to vector<176x128xf32>
    %cst_111 = arith.constant dense<0.000000e+00> : vector<16x128xf32>
    %135 = tpu.matmul %132, %134, %cst_111 {dimension_numbers = #tpu.dot_dimension_numbers<[1], [0], [0], [1], [0, 0, 1, 1], [], []>, precision = #tpu.contract_precision<fp32>} : vector<16x176xf32>, vector<176x128xf32>, vector<16x128xf32> -> vector<16x128xf32>
    %136 = arith.addf %131, %135 : vector<16x128xf32>
    %137 = vector.extract_strided_slice %105 {offsets = [3, 0], sizes = [16, 176], strides = [1, 1]} : vector<22x176xf32> to vector<16x176xf32>
    %c3_112 = arith.constant 3 : index
    %c0_113 = arith.constant 0 : index
    %c0_114 = arith.constant 0 : index
    %138 = vector.load %arg11[%c3_112, %c0_113, %c0_114] : memref<7x176x128xf32, #tpu.memory_space<vmem>>, vector<1x176x128xf32>
    %139 = vector.shape_cast %138 : vector<1x176x128xf32> to vector<176x128xf32>
    %cst_115 = arith.constant dense<0.000000e+00> : vector<16x128xf32>
    %140 = tpu.matmul %137, %139, %cst_115 {dimension_numbers = #tpu.dot_dimension_numbers<[1], [0], [0], [1], [0, 0, 1, 1], [], []>, precision = #tpu.contract_precision<fp32>} : vector<16x176xf32>, vector<176x128xf32>, vector<16x128xf32> -> vector<16x128xf32>
    %141 = arith.addf %136, %140 : vector<16x128xf32>
    %142 = vector.extract_strided_slice %103 {offsets = [3, 0], sizes = [16, 176], strides = [1, 1]} : vector<22x176xf32> to vector<16x176xf32>
    %c3_116 = arith.constant 3 : index
    %c0_117 = arith.constant 0 : index
    %c0_118 = arith.constant 0 : index
    %143 = vector.load %arg12[%c3_116, %c0_117, %c0_118] : memref<7x176x128xf32, #tpu.memory_space<vmem>>, vector<1x176x128xf32>
    %144 = vector.shape_cast %143 : vector<1x176x128xf32> to vector<176x128xf32>
    %cst_119 = arith.constant dense<0.000000e+00> : vector<16x128xf32>
    %145 = tpu.matmul %142, %144, %cst_119 {dimension_numbers = #tpu.dot_dimension_numbers<[1], [0], [0], [1], [0, 0, 1, 1], [], []>, precision = #tpu.contract_precision<fp32>} : vector<16x176xf32>, vector<176x128xf32>, vector<16x128xf32> -> vector<16x128xf32>
    %146 = arith.addf %141, %145 : vector<16x128xf32>
    %147 = vector.extract_strided_slice %105 {offsets = [4, 0], sizes = [16, 176], strides = [1, 1]} : vector<22x176xf32> to vector<16x176xf32>
    %c4_120 = arith.constant 4 : index
    %c0_121 = arith.constant 0 : index
    %c0_122 = arith.constant 0 : index
    %148 = vector.load %arg11[%c4_120, %c0_121, %c0_122] : memref<7x176x128xf32, #tpu.memory_space<vmem>>, vector<1x176x128xf32>
    %149 = vector.shape_cast %148 : vector<1x176x128xf32> to vector<176x128xf32>
    %cst_123 = arith.constant dense<0.000000e+00> : vector<16x128xf32>
    %150 = tpu.matmul %147, %149, %cst_123 {dimension_numbers = #tpu.dot_dimension_numbers<[1], [0], [0], [1], [0, 0, 1, 1], [], []>, precision = #tpu.contract_precision<fp32>} : vector<16x176xf32>, vector<176x128xf32>, vector<16x128xf32> -> vector<16x128xf32>
    %151 = arith.addf %146, %150 : vector<16x128xf32>
    %152 = vector.extract_strided_slice %103 {offsets = [4, 0], sizes = [16, 176], strides = [1, 1]} : vector<22x176xf32> to vector<16x176xf32>
    %c4_124 = arith.constant 4 : index
    %c0_125 = arith.constant 0 : index
    %c0_126 = arith.constant 0 : index
    %153 = vector.load %arg12[%c4_124, %c0_125, %c0_126] : memref<7x176x128xf32, #tpu.memory_space<vmem>>, vector<1x176x128xf32>
    %154 = vector.shape_cast %153 : vector<1x176x128xf32> to vector<176x128xf32>
    %cst_127 = arith.constant dense<0.000000e+00> : vector<16x128xf32>
    %155 = tpu.matmul %152, %154, %cst_127 {dimension_numbers = #tpu.dot_dimension_numbers<[1], [0], [0], [1], [0, 0, 1, 1], [], []>, precision = #tpu.contract_precision<fp32>} : vector<16x176xf32>, vector<176x128xf32>, vector<16x128xf32> -> vector<16x128xf32>
    %156 = arith.addf %151, %155 : vector<16x128xf32>
    %157 = vector.extract_strided_slice %105 {offsets = [5, 0], sizes = [16, 176], strides = [1, 1]} : vector<22x176xf32> to vector<16x176xf32>
    %c5_128 = arith.constant 5 : index
    %c0_129 = arith.constant 0 : index
    %c0_130 = arith.constant 0 : index
    %158 = vector.load %arg11[%c5_128, %c0_129, %c0_130] : memref<7x176x128xf32, #tpu.memory_space<vmem>>, vector<1x176x128xf32>
    %159 = vector.shape_cast %158 : vector<1x176x128xf32> to vector<176x128xf32>
    %cst_131 = arith.constant dense<0.000000e+00> : vector<16x128xf32>
    %160 = tpu.matmul %157, %159, %cst_131 {dimension_numbers = #tpu.dot_dimension_numbers<[1], [0], [0], [1], [0, 0, 1, 1], [], []>, precision = #tpu.contract_precision<fp32>} : vector<16x176xf32>, vector<176x128xf32>, vector<16x128xf32> -> vector<16x128xf32>
    %161 = arith.addf %156, %160 : vector<16x128xf32>
    %162 = vector.extract_strided_slice %103 {offsets = [5, 0], sizes = [16, 176], strides = [1, 1]} : vector<22x176xf32> to vector<16x176xf32>
    %c5_132 = arith.constant 5 : index
    %c0_133 = arith.constant 0 : index
    %c0_134 = arith.constant 0 : index
    %163 = vector.load %arg12[%c5_132, %c0_133, %c0_134] : memref<7x176x128xf32, #tpu.memory_space<vmem>>, vector<1x176x128xf32>
    %164 = vector.shape_cast %163 : vector<1x176x128xf32> to vector<176x128xf32>
    %cst_135 = arith.constant dense<0.000000e+00> : vector<16x128xf32>
    %165 = tpu.matmul %162, %164, %cst_135 {dimension_numbers = #tpu.dot_dimension_numbers<[1], [0], [0], [1], [0, 0, 1, 1], [], []>, precision = #tpu.contract_precision<fp32>} : vector<16x176xf32>, vector<176x128xf32>, vector<16x128xf32> -> vector<16x128xf32>
    %166 = arith.addf %161, %165 : vector<16x128xf32>
    %167 = vector.extract_strided_slice %105 {offsets = [6, 0], sizes = [16, 176], strides = [1, 1]} : vector<22x176xf32> to vector<16x176xf32>
    %c6_136 = arith.constant 6 : index
    %c0_137 = arith.constant 0 : index
    %c0_138 = arith.constant 0 : index
    %168 = vector.load %arg11[%c6_136, %c0_137, %c0_138] : memref<7x176x128xf32, #tpu.memory_space<vmem>>, vector<1x176x128xf32>
    %169 = vector.shape_cast %168 : vector<1x176x128xf32> to vector<176x128xf32>
    %cst_139 = arith.constant dense<0.000000e+00> : vector<16x128xf32>
    %170 = tpu.matmul %167, %169, %cst_139 {dimension_numbers = #tpu.dot_dimension_numbers<[1], [0], [0], [1], [0, 0, 1, 1], [], []>, precision = #tpu.contract_precision<fp32>} : vector<16x176xf32>, vector<176x128xf32>, vector<16x128xf32> -> vector<16x128xf32>
    %171 = arith.addf %166, %170 : vector<16x128xf32>
    %172 = vector.extract_strided_slice %103 {offsets = [6, 0], sizes = [16, 176], strides = [1, 1]} : vector<22x176xf32> to vector<16x176xf32>
    %c6_140 = arith.constant 6 : index
    %c0_141 = arith.constant 0 : index
    %c0_142 = arith.constant 0 : index
    %173 = vector.load %arg12[%c6_140, %c0_141, %c0_142] : memref<7x176x128xf32, #tpu.memory_space<vmem>>, vector<1x176x128xf32>
    %174 = vector.shape_cast %173 : vector<1x176x128xf32> to vector<176x128xf32>
    %cst_143 = arith.constant dense<0.000000e+00> : vector<16x128xf32>
    %175 = tpu.matmul %172, %174, %cst_143 {dimension_numbers = #tpu.dot_dimension_numbers<[1], [0], [0], [1], [0, 0, 1, 1], [], []>, precision = #tpu.contract_precision<fp32>} : vector<16x176xf32>, vector<176x128xf32>, vector<16x128xf32> -> vector<16x128xf32>
    %176 = arith.addf %171, %175 : vector<16x128xf32>
    %c0_144 = arith.constant 0 : index
    %c0_145 = arith.constant 0 : index
    %177 = vector.load %arg13[%c0_144, %c0_145] : memref<1x128xf32, #tpu.memory_space<vmem>>, vector<1x128xf32>
    %c0_146 = arith.constant 0 : index
    %c0_147 = arith.constant 0 : index
    %178 = vector.load %arg14[%c0_146, %c0_147] : memref<1x128xf32, #tpu.memory_space<vmem>>, vector<1x128xf32>
    %179 = arith.mulf %22, %178 : vector<1x128xf32>
    %180 = arith.addf %177, %179 : vector<1x128xf32>
    %181 = vector.broadcast %180 : vector<1x128xf32> to vector<16x128xf32>
    %182 = arith.addf %176, %181 : vector<16x128xf32>
    %183 = arith.negf %182 : vector<16x128xf32>
    %184 = math.exp %183 : vector<16x128xf32>
    %cst_148 = arith.constant 1.000000e+00 : f32
    %185 = vector.broadcast %cst_148 : f32 to vector<16x128xf32>
    %186 = arith.addf %185, %184 : vector<16x128xf32>
    %187 = arith.divf %185, %186 : vector<16x128xf32>
    %188 = arith.negf %187 : vector<16x128xf32>
    %189 = math.exp %188 : vector<16x128xf32>
    %cst_149 = arith.constant 1.000000e+00 : f32
    %190 = vector.broadcast %cst_149 : f32 to vector<16x128xf32>
    %191 = arith.addf %190, %189 : vector<16x128xf32>
    %192 = arith.divf %190, %191 : vector<16x128xf32>
    %193 = arith.mulf %192, %1 : vector<16x128xf32>
    %194 = arith.addf %4, %193 : vector<16x128xf32>
    %cst_150 = arith.constant 1.000000e+00 : f32
    %195 = vector.broadcast %cst_150 : f32 to vector<16x128xf32>
    %196 = arith.subf %195, %192 : vector<16x128xf32>
    %197 = arith.mulf %196, %3 : vector<16x128xf32>
    %198 = arith.addf %194, %197 : vector<16x128xf32>
    %c0_151 = arith.constant 0 : index
    %c0_152 = arith.constant 0 : index
    %199 = vector.load %arg19[%c0_151, %c0_152] : memref<128x128xf32, #tpu.memory_space<vmem>>, vector<128x128xf32>
    %cst_153 = arith.constant dense<0.000000e+00> : vector<16x128xf32>
    %200 = tpu.matmul %198, %199, %cst_153 {dimension_numbers = #tpu.dot_dimension_numbers<[1], [0], [0], [1], [0, 0, 1, 1], [], []>, precision = #tpu.contract_precision<fp32>} : vector<16x128xf32>, vector<128x128xf32>, vector<16x128xf32> -> vector<16x128xf32>
    %c0_154 = arith.constant 0 : index
    %c0_155 = arith.constant 0 : index
    %201 = vector.load %arg20[%c0_154, %c0_155] : memref<1x128xf32, #tpu.memory_space<vmem>>, vector<1x128xf32>
    %202 = vector.broadcast %201 : vector<1x128xf32> to vector<16x128xf32>
    %203 = arith.addf %200, %202 : vector<16x128xf32>
    %c0_156 = arith.constant 0 : index
    %c0_157 = arith.constant 0 : index
    %c0_158 = arith.constant 0 : index
    %204 = vector.load %arg21[%c0_156, %c0_157, %c0_158] : memref<1x16x128xf32, #tpu.memory_space<vmem>>, vector<1x16x128xf32>
    %205 = vector.shape_cast %204 : vector<1x16x128xf32> to vector<16x128xf32>
    %206 = vector.shape_cast %203 : vector<16x128xf32> to vector<1x16x128xf32>
    tpu.vector_store %arg21[%c0_156, %c0_157, %c0_158], %206 {strides = array<i32>} : memref<1x16x128xf32, #tpu.memory_space<vmem>>, vector<1x16x128xf32>,
    return
  }
  func.func @transform_0(%arg0: i32) -> (i32, i32, i32) {
    %c0_i32 = arith.constant 0 : i32
    %c0_i32_0 = arith.constant 0 : i32
    %c0_i32_1 = arith.constant 0 : i32
    return %arg0, %c0_i32, %c0_i32_0 : i32, i32, i32
  }
  func.func @transform_1(%arg0: i32) -> (i32, i32, i32) {
    %c0_i32 = arith.constant 0 : i32
    %c0_i32_0 = arith.constant 0 : i32
    %c0_i32_1 = arith.constant 0 : i32
    return %arg0, %c0_i32, %c0_i32_0 : i32, i32, i32
  }
  func.func @transform_2(%arg0: i32) -> (i32, i32, i32) {
    %c0_i32 = arith.constant 0 : i32
    %c0_i32_0 = arith.constant 0 : i32
    %c0_i32_1 = arith.constant 0 : i32
    return %arg0, %c0_i32, %c0_i32_0 : i32, i32, i32
  }
  func.func @transform_3(%arg0: i32) -> (i32, i32, i32, i32) {
    %c0_i32 = arith.constant 0 : i32
    %c0_i32_0 = arith.constant 0 : i32
    %c0_i32_1 = arith.constant 0 : i32
    %c0_i32_2 = arith.constant 0 : i32
    return %arg0, %c0_i32, %c0_i32_0, %c0_i32_1 : i32, i32, i32, i32
  }
  func.func @transform_4(%arg0: i32) -> (i32, i32) {
    %c0_i32 = arith.constant 0 : i32
    %c0_i32_0 = arith.constant 0 : i32
    %c0_i32_1 = arith.constant 0 : i32
    return %c0_i32, %c0_i32_0 : i32, i32
  }
  func.func @transform_5(%arg0: i32) -> (i32, i32) {
    %c0_i32 = arith.constant 0 : i32
    %c0_i32_0 = arith.constant 0 : i32
    %c0_i32_1 = arith.constant 0 : i32
    return %c0_i32, %c0_i32_0 : i32, i32
  }
  func.func @transform_6(%arg0: i32) -> (i32, i32) {
    %c0_i32 = arith.constant 0 : i32
    %c0_i32_0 = arith.constant 0 : i32
    %c0_i32_1 = arith.constant 0 : i32
    return %c0_i32, %c0_i32_0 : i32, i32
  }
  func.func @transform_7(%arg0: i32) -> (i32, i32) {
    %c0_i32 = arith.constant 0 : i32
    %c0_i32_0 = arith.constant 0 : i32
    %c0_i32_1 = arith.constant 0 : i32
    return %c0_i32, %c0_i32_0 : i32, i32
  }
  func.func @transform_8(%arg0: i32) -> (i32, i32, i32) {
    %c0_i32 = arith.constant 0 : i32
    %c0_i32_0 = arith.constant 0 : i32
    %c0_i32_1 = arith.constant 0 : i32
    %c0_i32_2 = arith.constant 0 : i32
    return %c0_i32, %c0_i32_0, %c0_i32_1 : i32, i32, i32
  }
  func.func @transform_9(%arg0: i32) -> (i32, i32, i32) {
    %c0_i32 = arith.constant 0 : i32
    %c0_i32_0 = arith.constant 0 : i32
    %c0_i32_1 = arith.constant 0 : i32
    %c0_i32_2 = arith.constant 0 : i32
    return %c0_i32, %c0_i32_0, %c0_i32_1 : i32, i32, i32
  }
  func.func @transform_10(%arg0: i32) -> (i32, i32, i32) {
    %c0_i32 = arith.constant 0 : i32
    %c0_i32_0 = arith.constant 0 : i32
    %c0_i32_1 = arith.constant 0 : i32
    %c0_i32_2 = arith.constant 0 : i32
    return %c0_i32, %c0_i32_0, %c0_i32_1 : i32, i32, i32
  }
  func.func @transform_11(%arg0: i32) -> (i32, i32, i32) {
    %c0_i32 = arith.constant 0 : i32
    %c0_i32_0 = arith.constant 0 : i32
    %c0_i32_1 = arith.constant 0 : i32
    %c0_i32_2 = arith.constant 0 : i32
    return %c0_i32, %c0_i32_0, %c0_i32_1 : i32, i32, i32
  }
  func.func @transform_12(%arg0: i32) -> (i32, i32) {
    %c0_i32 = arith.constant 0 : i32
    %c0_i32_0 = arith.constant 0 : i32
    %c0_i32_1 = arith.constant 0 : i32
    return %c0_i32, %c0_i32_0 : i32, i32
  }
  func.func @transform_13(%arg0: i32) -> (i32, i32) {
    %c0_i32 = arith.constant 0 : i32
    %c0_i32_0 = arith.constant 0 : i32
    %c0_i32_1 = arith.constant 0 : i32
    return %c0_i32, %c0_i32_0 : i32, i32
  }
  func.func @transform_14(%arg0: i32) -> (i32, i32) {
    %c0_i32 = arith.constant 0 : i32
    %c0_i32_0 = arith.constant 0 : i32
    %c0_i32_1 = arith.constant 0 : i32
    return %c0_i32, %c0_i32_0 : i32, i32
  }
  func.func @transform_15(%arg0: i32) -> (i32, i32) {
    %c0_i32 = arith.constant 0 : i32
    %c0_i32_0 = arith.constant 0 : i32
    %c0_i32_1 = arith.constant 0 : i32
    return %c0_i32, %c0_i32_0 : i32, i32
  }
  func.func @transform_16(%arg0: i32) -> (i32, i32) {
    %c0_i32 = arith.constant 0 : i32
    %c0_i32_0 = arith.constant 0 : i32
    %c0_i32_1 = arith.constant 0 : i32
    return %c0_i32, %c0_i32_0 : i32, i32
  }
  func.func @transform_17(%arg0: i32) -> (i32, i32) {
    %c0_i32 = arith.constant 0 : i32
    %c0_i32_0 = arith.constant 0 : i32
    %c0_i32_1 = arith.constant 0 : i32
    return %c0_i32, %c0_i32_0 : i32, i32
  }
  func.func @transform_18(%arg0: i32) -> (i32, i32) {
    %c0_i32 = arith.constant 0 : i32
    %c0_i32_0 = arith.constant 0 : i32
    %c0_i32_1 = arith.constant 0 : i32
    return %c0_i32, %c0_i32_0 : i32, i32
  }
  func.func @transform_19(%arg0: i32) -> (i32, i32) {
    %c0_i32 = arith.constant 0 : i32
    %c0_i32_0 = arith.constant 0 : i32
    %c0_i32_1 = arith.constant 0 : i32
    return %c0_i32, %c0_i32_0 : i32, i32
  }
  func.func @transform_20(%arg0: i32) -> (i32, i32, i32) {
    %c0_i32 = arith.constant 0 : i32
    %c0_i32_0 = arith.constant 0 : i32
    %c0_i32_1 = arith.constant 0 : i32
    return %arg0, %c0_i32, %c0_i32_0 : i32, i32, i32
  }
}

</mosaic_0001>

<llo_original>
// kernel: tile.16
$region0: #{tile.16}
  #allocation0 [shape = 's32[1]{0}', space=sflag, size = 0x4, scoped, tag = 'scoped memory for tile.16']
  %s0 = inlined_call_operand.vmem [shape: f32[8], index: 0, kind: input, shape index: {}]
  %s1 = inlined_call_operand.vmem [shape: f32[16,8], index: 1, kind: output, shape index: {}]
  // Predicated region
  $region2: #{tile.16} parent=0 // pred_check
    _
  $region3: #{tile.16} parent=0 // pred_check_branch
    %3 = sbr.rel (0) target = $region5
  $region4: #{tile.16} parent=0 // pred_region
    _
  $region5: #{tile.16} parent=0 // pred_fallthru
    _
  %v4 = vld [vmem:[%s0] ss:$0 sm:$0xff]
  %5 = vst [vmem:[%s1] sm:$0xff] %v4
  %s6 = scalar_lea.vmem %s1, 8
  %7 = vst [vmem:[%s6] sm:$0xff] %v4

</llo_original>
